<compile_context>
chip_gen: v7x
topology: tpu7x:2x2x1
jax: 0.10.0
libtpu: 0.0.40
codegen_flags: <defaults>
</compile_context>

<pallas_src>
import functools

import jax
import jax.numpy as jnp
import numpy as np
from jax.experimental import pallas as pl
from jax.experimental.pallas import tpu as pltpu

EPS = 1e-5


def _round_up(x, m):
    return ((x + m - 1) // m) * m


# ----------------------------------------------------------------------------
# Kernel: one batch tile per grid step, weights resident in VMEM.
# ----------------------------------------------------------------------------
def nalu_kernel(x_ref, w_ref, g_ref, o_ref):
    x = x_ref[...]        # (TILE_B, Inp)   f32, zero-padded activations
    w = w_ref[...]        # (Inp, Outp)     effective NAC weight, already W.T
    gw = g_ref[...]       # (Inp, Outp)     G.T

    # Three separate MXU calls — no wasted quadrant, no concat copies.
    a = jnp.dot(x, w, preferred_element_type=jnp.float32)            # X @ W.T
    gate = jax.nn.sigmoid(
        jnp.dot(x, gw, preferred_element_type=jnp.float32))          # sigmoid(X @ G.T)
    log_in = jnp.log(jnp.abs(x) + EPS)
    m = jnp.exp(
        jnp.dot(log_in, w, preferred_element_type=jnp.float32))      # exp(log|X| @ W.T)

    o_ref[...] = gate * a + (1.0 - gate) * m


# ----------------------------------------------------------------------------
# One-time parameter preprocessing (NOT in the per-call hot path).
# ----------------------------------------------------------------------------
def prepare_params(w_, m_, g_):
    """w_/m_/g_: (Out, In) PyTorch linear-weight layout.

    Returns (wt_p, gt_p): (Inp, Outp) f32, pre-transposed, zero-padded, with
    the NAC gating tanh(W_)*sigmoid(M_) already applied.
    """
    out_dim, in_dim = w_.shape
    inp = _round_up(in_dim, 128)
    outp = _round_up(out_dim, 128)

    w_eff = jnp.tanh(w_.astype(jnp.float32)) * jax.nn.sigmoid(m_.astype(jnp.float32))
    wt_p = jnp.zeros((inp, outp), jnp.float32).at[:in_dim, :out_dim].set(w_eff.T)
    gt_p = jnp.zeros((inp, outp), jnp.float32).at[:in_dim, :out_dim].set(
        g_.astype(jnp.float32).T)
    return wt_p, gt_p


# ----------------------------------------------------------------------------
# Forward wrapper: pads only X, tiles over batch.
# ----------------------------------------------------------------------------
@functools.partial(jax.jit, static_argnames=("out_dim", "in_dim"))
def nalu_forward(x, wt_p, gt_p, *, in_dim, out_dim):
    x = x.astype(jnp.float32)
    batch = x.shape[0]
    inp, outp = wt_p.shape

    # Batch tile: multiple of 8 sublanes; cap so large batches pipeline.
    tile_b = min(256, _round_up(batch, 8))
    bp = _round_up(batch, tile_b)
    grid = (bp // tile_b,)

    x_p = jnp.zeros((bp, inp), jnp.float32).at[:batch, :in_dim].set(x)

    # VMEM budget from the actual tile footprint (weights + double-buffered
    # x/out tiles + in-kernel temporaries), with headroom.
    est_bytes = 4 * (
        4 * inp * outp                 # 2 resident weight mats (x2 buffering slack)
        + 4 * tile_b * inp             # x tile, double-buffered (+ slack)
        + 4 * tile_b * outp            # out tile, double-buffered (+ slack)
        + 8 * tile_b * max(inp, outp)  # a / gate / log_in / m temporaries
    )
    vmem_limit = int(min(max(est_bytes, 32 * 1024 * 1024), 100 * 1024 * 1024))

    out_p = pl.pallas_call(
        nalu_kernel,
        out_shape=jax.ShapeDtypeStruct((bp, outp), jnp.float32),
        grid=grid,
        in_specs=[
            pl.BlockSpec((tile_b, inp), lambda i: (i, 0)),   # x: one batch tile/step
            pl.BlockSpec((inp, outp), lambda i: (0, 0)),     # W.T: VMEM-resident
            pl.BlockSpec((inp, outp), lambda i: (0, 0)),     # G.T: VMEM-resident
        ],
        out_specs=pl.BlockSpec((tile_b, outp), lambda i: (i, 0)),
        compiler_params=pltpu.CompilerParams(
            dimension_semantics=("parallel",),
            vmem_limit_bytes=vmem_limit,
        ),
    )(x_p, wt_p, gt_p)

    return out_p[:batch, :out_dim]


# ----------------------------------------------------------------------------
# Reference + test
# ----------------------------------------------------------------------------
def xavier_uniform(key, out_shape, in_shape):
    limit = float(np.sqrt(6.0 / (in_shape + out_shape)))
    return jax.random.uniform(
        key, (out_shape, in_shape), dtype=jnp.float32, minval=-limit, maxval=limit
    )


def reference(x, w_, m_, g_):
    w = jnp.tanh(w_) * jax.nn.sigmoid(m_)
    a = x @ w.T
    g = jax.nn.sigmoid(x @ g_.T)
    m = jnp.exp(jnp.log(jnp.abs(x) + EPS) @ w.T)
    return g * a + (1.0 - g) * m


if __name__ == "__main__":
    batch, in_shape, out_shape = 8, 32, 16

    key = jax.random.PRNGKey(0)
    kx, kw, km, kg = jax.random.split(key, 4)

    x = jax.random.normal(kx, (batch, in_shape), dtype=jnp.float32)
    w_ = xavier_uniform(kw, out_shape, in_shape)
    m_ = xavier_uniform(km, out_shape, in_shape)
    g_ = xavier_uniform(kg, out_shape, in_shape)

    # One-time param prep (transpose + pad + NAC weight gating).
    wt_p, gt_p = prepare_params(w_, m_, g_)

    out = nalu_forward(x, wt_p, gt_p, in_dim=in_shape, out_dim=out_shape)
    out = jax.block_until_ready(out)

    ref = reference(x, w_, m_, g_)
    np.testing.assert_allclose(np.asarray(out), np.asarray(ref), rtol=1e-5, atol=1e-5)

    print("KERNEL_OK")
</pallas_src>

<mosaic_0001>
module attributes {stable_mosaic.version = 11 : i64} {
  func.func @nalu_kernel(%arg0: i32, %arg1: memref<8x128xf32, #tpu.memory_space<vmem>>, %arg2: memref<128x128xf32, #tpu.memory_space<vmem>>, %arg3: memref<128x128xf32, #tpu.memory_space<vmem>>, %arg4: memref<8x128xf32, #tpu.memory_space<vmem>>) attributes {dimension_semantics = [#tpu.dimension_semantics<parallel>], iteration_bounds = array<i64: 1>, scalar_prefetch = 0 : i64, scratch_operands = 0 : i64, tpu.core_type = #tpu.core_type<tc>, window_params = [{transform_indices = @transform_0, window_bounds = array<i64: 8, 128>}, {pipeline_mode = #tpu.pipeline_mode<synchronous>, transform_indices = @transform_1, window_bounds = array<i64: 128, 128>}, {pipeline_mode = #tpu.pipeline_mode<synchronous>, transform_indices = @transform_2, window_bounds = array<i64: 128, 128>}, {transform_indices = @transform_3, window_bounds = array<i64: 8, 128>}]} {
    %c0 = arith.constant 0 : index
    %c0_0 = arith.constant 0 : index
    %0 = vector.load %arg1[%c0, %c0_0] : memref<8x128xf32, #tpu.memory_space<vmem>>, vector<8x128xf32>
    %c0_1 = arith.constant 0 : index
    %c0_2 = arith.constant 0 : index
    %1 = vector.load %arg2[%c0_1, %c0_2] : memref<128x128xf32, #tpu.memory_space<vmem>>, vector<128x128xf32>
    %c0_3 = arith.constant 0 : index
    %c0_4 = arith.constant 0 : index
    %2 = vector.load %arg3[%c0_3, %c0_4] : memref<128x128xf32, #tpu.memory_space<vmem>>, vector<128x128xf32>
    %cst = arith.constant dense<0.000000e+00> : vector<8x128xf32>
    %3 = tpu.matmul %0, %1, %cst {dimension_numbers = #tpu.dot_dimension_numbers<[1], [0], [0], [1], [0, 0, 1, 1], [], []>} : vector<8x128xf32>, vector<128x128xf32>, vector<8x128xf32> -> vector<8x128xf32>
    %cst_5 = arith.constant dense<0.000000e+00> : vector<8x128xf32>
    %4 = tpu.matmul %0, %2, %cst_5 {dimension_numbers = #tpu.dot_dimension_numbers<[1], [0], [0], [1], [0, 0, 1, 1], [], []>} : vector<8x128xf32>, vector<128x128xf32>, vector<8x128xf32> -> vector<8x128xf32>
    %5 = arith.negf %4 : vector<8x128xf32>
    %6 = math.exp %5 : vector<8x128xf32>
    %cst_6 = arith.constant 1.000000e+00 : f32
    %7 = vector.broadcast %cst_6 : f32 to vector<8x128xf32>
    %8 = arith.addf %7, %6 : vector<8x128xf32>
    %9 = arith.divf %7, %8 : vector<8x128xf32>
    %10 = math.absf %0 : vector<8x128xf32>
    %cst_7 = arith.constant 9.99999974E-6 : f32
    %11 = vector.broadcast %cst_7 : f32 to vector<8x128xf32>
    %12 = arith.addf %10, %11 : vector<8x128xf32>
    %13 = math.log %12 : vector<8x128xf32>
    %cst_8 = arith.constant dense<0.000000e+00> : vector<8x128xf32>
    %14 = tpu.matmul %13, %1, %cst_8 {dimension_numbers = #tpu.dot_dimension_numbers<[1], [0], [0], [1], [0, 0, 1, 1], [], []>} : vector<8x128xf32>, vector<128x128xf32>, vector<8x128xf32> -> vector<8x128xf32>
    %15 = math.exp %14 : vector<8x128xf32>
    %16 = arith.mulf %9, %3 : vector<8x128xf32>
    %cst_9 = arith.constant 1.000000e+00 : f32
    %17 = vector.broadcast %cst_9 : f32 to vector<8x128xf32>
    %18 = arith.subf %17, %9 : vector<8x128xf32>
    %19 = arith.mulf %18, %15 : vector<8x128xf32>
    %20 = arith.addf %16, %19 : vector<8x128xf32>
    %c0_10 = arith.constant 0 : index
    %c0_11 = arith.constant 0 : index
    %21 = vector.load %arg4[%c0_10, %c0_11] : memref<8x128xf32, #tpu.memory_space<vmem>>, vector<8x128xf32>
    tpu.vector_store %arg4[%c0_10, %c0_11], %20 {strides = array<i32>} : memref<8x128xf32, #tpu.memory_space<vmem>>, vector<8x128xf32>,
    return
  }
  func.func @transform_0(%arg0: i32) -> (i32, i32) {
    %c0_i32 = arith.constant 0 : i32
    %c0_i32_0 = arith.constant 0 : i32
    return %arg0, %c0_i32 : i32, i32
  }
  func.func @transform_1(%arg0: i32) -> (i32, i32) {
    %c0_i32 = arith.constant 0 : i32
    %c0_i32_0 = arith.constant 0 : i32
    %c0_i32_1 = arith.constant 0 : i32
    return %c0_i32, %c0_i32_0 : i32, i32
  }
  func.func @transform_2(%arg0: i32) -> (i32, i32) {
    %c0_i32 = arith.constant 0 : i32
    %c0_i32_0 = arith.constant 0 : i32
    %c0_i32_1 = arith.constant 0 : i32
    return %c0_i32, %c0_i32_0 : i32, i32
  }
  func.func @transform_3(%arg0: i32) -> (i32, i32) {
    %c0_i32 = arith.constant 0 : i32
    %c0_i32_0 = arith.constant 0 : i32
    return %arg0, %c0_i32 : i32, i32
  }
}

</mosaic_0001>

<llo_original>
// kernel: nalu_forward.1
$region0: #{nalu_forward.1}
  #allocation0 [shape = 'u32[]', space=smem, size = 0x4, offset = 0x4, fixed_abs, tag = 'smem constant byte address 0x4 - core index']
  #allocation1 [shape = 'u32[144,128]{1,0:T(1,128)}', space=vmem, size = 0x12000, scoped, tag = 'internal scratch']
  %s0 = inlined_call_operand.vmem [shape: f32[8,128], index: 0, kind: input, shape index: {}]
  %s1 = inlined_call_operand.hbm [shape: f32[128,128], index: 1, kind: input, shape index: {}]
  %s2 = inlined_call_operand.hbm [shape: f32[128,128], index: 2, kind: input, shape index: {}]
  %s3 = inlined_call_operand.hbm [shape: f32[8,128], index: 3, kind: output, shape index: {}]
  %s4 = sld [smem:[#allocation0]]
  $region30: #{nalu_forward.1} parent=0
    _
  %s6 = ssub.s32 1, %s4
  %s7 = scalar_select 0, %s6, %s4
  $region1: #{nalu_forward.1} parent=0
    #allocation2 [shape = 'u8[65536]{0}', space=vmem, size = 0x10000, scoped, tag = 'input window, operand 1, single buffered']
    #allocation3 [shape = 's32[1]{0}', space=sflag, size = 0x4, scoped, tag = 'scoped memory for nalu_forward.1']
    #allocation4 [shape = 's32[1]{0}', space=sflag, size = 0x4, scoped, tag = 'scoped memory for nalu_forward.1']
    #allocation5 [shape = 'u8[65536]{0}', space=vmem, size = 0x10000, scoped, tag = 'input window, operand 2, single buffered']
    #allocation6 [shape = 's32[1]{0}', space=sflag, size = 0x4, scoped, tag = 'scoped memory for nalu_forward.1']
    #allocation7 [shape = 'u8[4096]{0}', space=vmem, size = 0x1000, scoped, tag = 'output window, operand 0, single buffered']
    %8 = vsyncpa [#allocation3], 0
    %9 = vsyncpa [#allocation6], 0
    %10 = vsyncpa [#allocation4], 0
    // Predicated region
    $region2: #{nalu_forward.1} parent=1 // pred_check
      _
    $region3: #{nalu_forward.1} parent=1 // pred_check_branch
      %12 = sbr.rel (0) target = $region5
    $region4: #{nalu_forward.1} parent=1 // pred_region
      _
    $region5: #{nalu_forward.1} parent=1 // pred_fallthru
      _
    // Predicated region
    $region6: #{nalu_forward.1} parent=1 // pred_check
      _
    $region7: #{nalu_forward.1} parent=1 // pred_check_branch
      %14 = sbr.rel (0) target = $region9
    $region8: #{nalu_forward.1} parent=1 // pred_region
      %s16 = ssub.s32 2048, 2048
      %17 = vsyncadd [#allocation3], %s16
      %s18 = sshll.u32 [#allocation2], 4
      %s19 = int_to_ptr.vmem [resolvable:$true] %s18
      %24 = dma.hbm_to_vmem [thread:$0]  %s1, 2048, %s19, [#allocation3], 128, 128, 8
    $region9: #{nalu_forward.1} parent=1 // pred_fallthru
      _
    // Predicated region
    $region10: #{nalu_forward.1} parent=1 // pred_check
      _
    $region11: #{nalu_forward.1} parent=1 // pred_check_branch
      %26 = sbr.rel (0) target = $region13
    $region12: #{nalu_forward.1} parent=1 // pred_region
      %s28 = ssub.s32 2048, 2048
      %29 = vsyncadd [#allocation6], %s28
      %s30 = sshll.u32 [#allocation5], 4
      %s31 = int_to_ptr.vmem [resolvable:$true] %s30
      %36 = dma.hbm_to_vmem [thread:$0]  %s2, 2048, %s31, [#allocation6], 128, 128, 8
    $region13: #{nalu_forward.1} parent=1 // pred_fallthru
      _
    // Predicated region
    $region14: #{nalu_forward.1} parent=1 // pred_check
      _
    $region15: #{nalu_forward.1} parent=1 // pred_check_branch
      %38 = sbr.rel (0) target = $region17
    $region16: #{nalu_forward.1} parent=1 // pred_region
      %39 = dma.done [#allocation3], 2048
    $region17: #{nalu_forward.1} parent=1 // pred_fallthru
      _
    // Predicated region
    $region18: #{nalu_forward.1} parent=1 // pred_check
      _
    $region19: #{nalu_forward.1} parent=1 // pred_check_branch
      %41 = sbr.rel (0) target = $region21
    $region20: #{nalu_forward.1} parent=1 // pred_region
      %42 = dma.done [#allocation6], 2048
    $region21: #{nalu_forward.1} parent=1 // pred_fallthru
      _
    %v43 = vld [vmem:[%s0] sm:$0xff]
    %v44 = vld [vmem:[#allocation2] sm:$0xff]
    %v45 = vld [vmem:[#allocation2 + $0x8] sm:$0xff]
    %v46 = vld [vmem:[#allocation2 + $0x10] sm:$0xff]
    %v47 = vld [vmem:[#allocation2 + $0x18] sm:$0xff]
    %v48 = vld [vmem:[#allocation2 + $0x20] sm:$0xff]
    %v49 = vld [vmem:[#allocation2 + $0x28] sm:$0xff]
    %v50 = vld [vmem:[#allocation2 + $0x30] sm:$0xff]
    %v51 = vld [vmem:[#allocation2 + $0x38] sm:$0xff]
    %v52 = vld [vmem:[#allocation2 + $0x40] sm:$0xff]
    %v53 = vld [vmem:[#allocation2 + $0x48] sm:$0xff]
    %v54 = vld [vmem:[#allocation2 + $0x50] sm:$0xff]
    %v55 = vld [vmem:[#allocation2 + $0x58] sm:$0xff]
    %v56 = vld [vmem:[#allocation2 + $0x60] sm:$0xff]
    %v57 = vld [vmem:[#allocation2 + $0x68] sm:$0xff]
    %v58 = vld [vmem:[#allocation2 + $0x70] sm:$0xff]
    %v59 = vld [vmem:[#allocation2 + $0x78] sm:$0xff]
    %v60 = vld [vmem:[#allocation5] sm:$0xff]
    %v61 = vld [vmem:[#allocation5 + $0x8] sm:$0xff]
    %v62 = vld [vmem:[#allocation5 + $0x10] sm:$0xff]
    %v63 = vld [vmem:[#allocation5 + $0x18] sm:$0xff]
    %v64 = vld [vmem:[#allocation5 + $0x20] sm:$0xff]
    %v65 = vld [vmem:[#allocation5 + $0x28] sm:$0xff]
    %v66 = vld [vmem:[#allocation5 + $0x30] sm:$0xff]
    %v67 = vld [vmem:[#allocation5 + $0x38] sm:$0xff]
    %v68 = vld [vmem:[#allocation5 + $0x40] sm:$0xff]
    %v69 = vld [vmem:[#allocation5 + $0x48] sm:$0xff]
    %v70 = vld [vmem:[#allocation5 + $0x50] sm:$0xff]
    %v71 = vld [vmem:[#allocation5 + $0x58] sm:$0xff]
    %v72 = vld [vmem:[#allocation5 + $0x60] sm:$0xff]
    %v73 = vld [vmem:[#allocation5 + $0x68] sm:$0xff]
    %v74 = vld [vmem:[#allocation5 + $0x70] sm:$0xff]
    %v75 = vld [vmem:[#allocation5 + $0x78] sm:$0xff]
    %76 = vmatprep.subr.mxu0 0.0
    %77 = vmatpush1.msra.mxu0 %v44
    %78 = vmatprep.subr.mxu0 0.0
    %79 = vmatpush1.msra.mxu0 %v45
    %80 = vmatprep.subr.mxu0 0.0
    %81 = vmatpush1.msra.mxu0 %v46
    %82 = vmatprep.subr.mxu0 0.0
    %83 = vmatpush1.msra.mxu0 %v47
    %84 = vmatprep.subr.mxu0 0.0
    %85 = vmatpush1.msra.mxu0 %v48
    %86 = vmatprep.subr.mxu0 0.0
    %87 = vmatpush1.msra.mxu0 %v49
    %88 = vmatprep.subr.mxu0 0.0
    %89 = vmatpush1.msra.mxu0 %v50
    %90 = vmatprep.subr.mxu0 0.0
    %91 = vmatpush1.msra.mxu0 %v51
    %92 = vmatprep.subr.mxu0 0.0
    %93 = vmatpush1.msra.mxu0 %v52
    %94 = vmatprep.subr.mxu0 0.0
    %95 = vmatpush1.msra.mxu0 %v53
    %96 = vmatprep.subr.mxu0 0.0
    %97 = vmatpush1.msra.mxu0 %v54
    %98 = vmatprep.subr.mxu0 0.0
    %99 = vmatpush1.msra.mxu0 %v55
    %100 = vmatprep.subr.mxu0 0.0
    %101 = vmatpush1.msra.mxu0 %v56
    %102 = vmatprep.subr.mxu0 0.0
    %103 = vmatpush1.msra.mxu0 %v57
    %104 = vmatprep.subr.mxu0 0.0
    %105 = vmatpush1.msra.mxu0 %v58
    %106 = vmatprep.subr.mxu0 0.0
    %107 = vmatpush1.msra.mxu0 %v59
    %108 = vmatprep.subr.mxu0 0.0
    %109 = vmatpush1.msra.mxu0 0.0
    %110 = vmatprep.subr.mxu0 0.0
    %111 = vmatpush1.msra.mxu0 0.0
    %112 = vmatprep.subr.mxu0 0.0
    %113 = vmatpush1.msra.mxu0 0.0
    %114 = vmatprep.subr.mxu0 0.0
    %115 = vmatpush1.msra.mxu0 0.0
    %116 = vmatprep.subr.mxu0 0.0
    %117 = vmatpush1.msra.mxu0 0.0
    %118 = vmatprep.subr.mxu0 0.0
    %119 = vmatpush1.msra.mxu0 0.0
    %120 = vmatprep.subr.mxu0 0.0
    %121 = vmatpush1.msra.mxu0 0.0
    %122 = vmatprep.subr.mxu0 0.0
    %123 = vmatpush1.msra.mxu0 0.0
    %124 = vmatprep.subr.mxu0 0.0
    %125 = vmatpush1.msra.mxu0 0.0
    %126 = vmatprep.subr.mxu0 0.0
    %127 = vmatpush1.msra.mxu0 0.0
    %128 = vmatprep.subr.mxu0 0.0
    %129 = vmatpush1.msra.mxu0 0.0
    %130 = vmatprep.subr.mxu0 0.0
    %131 = vmatpush1.msra.mxu0 0.0
    %132 = vmatprep.subr.mxu0 0.0
    %133 = vmatpush1.msra.mxu0 0.0
    %134 = vmatprep.subr.mxu0 0.0
    %135 = vmatpush1.msra.mxu0 0.0
    %136 = vmatprep.subr.mxu0 0.0
    %137 = vmatpush1.msra.mxu0 0.0
    %138 = vmatprep.subr.mxu0 0.0
    %139 = vmatpush1.msra.mxu0 0.0
    %140 = vmatprep.mubr.f32.mxu0 0.0
    %141 = vmatmul.mubr.f32.gmra.mrb[0].mxu0 %v43
    %v142 = vpop.f32.mrb[0].mxu0
    %v143 = vadd.f32 0.0, %v142
    %v144 = vpop.f32.mrb[0].mxu0
    %145 = vdwg.mxu0
    %146 = vmatprep.subr.mxu0 0.0
    %147 = vmatpush1.msra.mxu0 %v60
    %148 = vmatprep.subr.mxu0 0.0
    %149 = vmatpush1.msra.mxu0 %v61
    %150 = vmatprep.subr.mxu0 0.0
    %151 = vmatpush1.msra.mxu0 %v62
    %152 = vmatprep.subr.mxu0 0.0
    %153 = vmatpush1.msra.mxu0 %v63
    %154 = vmatprep.subr.mxu0 0.0
    %155 = vmatpush1.msra.mxu0 %v64
    %156 = vmatprep.subr.mxu0 0.0
    %157 = vmatpush1.msra.mxu0 %v65
    %158 = vmatprep.subr.mxu0 0.0
    %159 = vmatpush1.msra.mxu0 %v66
    %160 = vmatprep.subr.mxu0 0.0
    %161 = vmatpush1.msra.mxu0 %v67
    %162 = vmatprep.subr.mxu0 0.0
    %163 = vmatpush1.msra.mxu0 %v68
    %164 = vmatprep.subr.mxu0 0.0
    %165 = vmatpush1.msra.mxu0 %v69
    %166 = vmatprep.subr.mxu0 0.0
    %167 = vmatpush1.msra.mxu0 %v70
    %168 = vmatprep.subr.mxu0 0.0
    %169 = vmatpush1.msra.mxu0 %v71
    %170 = vmatprep.subr.mxu0 0.0
    %171 = vmatpush1.msra.mxu0 %v72
    %172 = vmatprep.subr.mxu0 0.0
    %173 = vmatpush1.msra.mxu0 %v73
    %174 = vmatprep.subr.mxu0 0.0
    %175 = vmatpush1.msra.mxu0 %v74
    %176 = vmatprep.subr.mxu0 0.0
    %177 = vmatpush1.msra.mxu0 %v75
    %178 = vmatprep.subr.mxu0 0.0
    %179 = vmatpush1.msra.mxu0 0.0
    %180 = vmatprep.subr.mxu0 0.0
    %181 = vmatpush1.msra.mxu0 0.0
    %182 = vmatprep.subr.mxu0 0.0
    %183 = vmatpush1.msra.mxu0 0.0
    %184 = vmatprep.subr.mxu0 0.0
    %185 = vmatpush1.msra.mxu0 0.0
    %186 = vmatprep.subr.mxu0 0.0
    %187 = vmatpush1.msra.mxu0 0.0
    %188 = vmatprep.subr.mxu0 0.0
    %189 = vmatpush1.msra.mxu0 0.0
    %190 = vmatprep.subr.mxu0 0.0
    %191 = vmatpush1.msra.mxu0 0.0
    %192 = vmatprep.subr.mxu0 0.0
    %193 = vmatpush1.msra.mxu0 0.0
    %194 = vmatprep.subr.mxu0 0.0
    %195 = vmatpush1.msra.mxu0 0.0
    %196 = vmatprep.subr.mxu0 0.0
    %197 = vmatpush1.msra.mxu0 0.0
    %198 = vmatprep.subr.mxu0 0.0
    %199 = vmatpush1.msra.mxu0 0.0
    %200 = vmatprep.subr.mxu0 0.0
    %201 = vmatpush1.msra.mxu0 0.0
    %202 = vmatprep.subr.mxu0 0.0
    %203 = vmatpush1.msra.mxu0 0.0
    %204 = vmatprep.subr.mxu0 0.0
    %205 = vmatpush1.msra.mxu0 0.0
    %206 = vmatprep.subr.mxu0 0.0
    %207 = vmatpush1.msra.mxu0 0.0
    %208 = vmatprep.subr.mxu0 0.0
    %209 = vmatpush1.msra.mxu0 0.0
    %210 = vmatprep.mubr.f32.mxu0 0.0
    %211 = vmatmul.mubr.f32.gmra.mrb[0].mxu0 %v43
    %v212 = vpop.f32.mrb[0].mxu0
    %v213 = vadd.f32 0.0, %v212
    %v214 = vpop.f32.mrb[0].mxu0
    %215 = vdwg.mxu0
    %v216 = vxor.u32 %v213, 2147483648
    %v217 = vmul.f32 %v216, 1.442695
    %v218 = vpow.pop %v217
    %v219 = vadd.f32 %v218, 1.0
    %v220 = vrcp.pop %v219
    %v221 = vmul.f32 1.0, %v220
    %v222 = vand.u32 2147483647, %v43
    %v223 = vadd.f32 %v222, 1e-05
    %v224 = vlog2.pop %v223
    %v225 = vmul.f32 %v224, 0.6931472
    %226 = vmatprep.subr.mxu0 0.0
    %227 = vmatpush1.msra.mxu0 %v44
    %228 = vmatprep.subr.mxu0 0.0
    %229 = vmatpush1.msra.mxu0 %v45
    %230 = vmatprep.subr.mxu0 0.0
    %231 = vmatpush1.msra.mxu0 %v46
    %232 = vmatprep.subr.mxu0 0.0
    %233 = vmatpush1.msra.mxu0 %v47
    %234 = vmatprep.subr.mxu0 0.0
    %235 = vmatpush1.msra.mxu0 %v48
    %236 = vmatprep.subr.mxu0 0.0
    %237 = vmatpush1.msra.mxu0 %v49
    %238 = vmatprep.subr.mxu0 0.0
    %239 = vmatpush1.msra.mxu0 %v50
    %240 = vmatprep.subr.mxu0 0.0
    %241 = vmatpush1.msra.mxu0 %v51
    %242 = vmatprep.subr.mxu0 0.0
    %243 = vmatpush1.msra.mxu0 %v52
    %244 = vmatprep.subr.mxu0 0.0
    %245 = vmatpush1.msra.mxu0 %v53
    %246 = vmatprep.subr.mxu0 0.0
    %247 = vmatpush1.msra.mxu0 %v54
    %248 = vmatprep.subr.mxu0 0.0
    %249 = vmatpush1.msra.mxu0 %v55
    %250 = vmatprep.subr.mxu0 0.0
    %251 = vmatpush1.msra.mxu0 %v56
    %252 = vmatprep.subr.mxu0 0.0
    %253 = vmatpush1.msra.mxu0 %v57
    %254 = vmatprep.subr.mxu0 0.0
    %255 = vmatpush1.msra.mxu0 %v58
    %256 = vmatprep.subr.mxu0 0.0
    %257 = vmatpush1.msra.mxu0 %v59
    %258 = vmatprep.subr.mxu0 0.0
    %259 = vmatpush1.msra.mxu0 0.0
    %260 = vmatprep.subr.mxu0 0.0
    %261 = vmatpush1.msra.mxu0 0.0
    %262 = vmatprep.subr.mxu0 0.0
    %263 = vmatpush1.msra.mxu0 0.0
    %264 = vmatprep.subr.mxu0 0.0
    %265 = vmatpush1.msra.mxu0 0.0
    %266 = vmatprep.subr.mxu0 0.0
    %267 = vmatpush1.msra.mxu0 0.0
    %268 = vmatprep.subr.mxu0 0.0
    %269 = vmatpush1.msra.mxu0 0.0
    %270 = vmatprep.subr.mxu0 0.0
    %271 = vmatpush1.msra.mxu0 0.0
    %272 = vmatprep.subr.mxu0 0.0
    %273 = vmatpush1.msra.mxu0 0.0
    %274 = vmatprep.subr.mxu0 0.0
    %275 = vmatpush1.msra.mxu0 0.0
    %276 = vmatprep.subr.mxu0 0.0
    %277 = vmatpush1.msra.mxu0 0.0
    %278 = vmatprep.subr.mxu0 0.0
    %279 = vmatpush1.msra.mxu0 0.0
    %280 = vmatprep.subr.mxu0 0.0
    %281 = vmatpush1.msra.mxu0 0.0
    %282 = vmatprep.subr.mxu0 0.0
    %283 = vmatpush1.msra.mxu0 0.0
    %284 = vmatprep.subr.mxu0 0.0
    %285 = vmatpush1.msra.mxu0 0.0
    %286 = vmatprep.subr.mxu0 0.0
    %287 = vmatpush1.msra.mxu0 0.0
    %288 = vmatprep.subr.mxu0 0.0
    %289 = vmatpush1.msra.mxu0 0.0
    %290 = vmatprep.mubr.f32.mxu0 0.0
    %291 = vmatmul.mubr.f32.gmra.mrb[0].mxu0 %v225
    %v292 = vpop.f32.mrb[0].mxu0
    %v293 = vadd.f32 0.0, %v292
    %v294 = vpop.f32.mrb[0].mxu0
    %295 = vdwg.mxu0
    %v296 = vmul.f32 %v293, 1.442695
    %v297 = vpow.pop %v296
    %v298 = vmul.f32 %v221, %v143
    %v299 = vsub.f32 1.0, %v221
    %v300 = vmul.f32 %v299, %v297
    %v301 = vadd.f32 %v298, %v300
    %302 = vst [vmem:[#allocation7] sm:$0xff] %v301
    // Predicated region
    $region22: #{nalu_forward.1} parent=1 // pred_check
      _
    $region23: #{nalu_forward.1} parent=1 // pred_check_branch
      %304 = sbr.rel (0) target = $region25
    $region24: #{nalu_forward.1} parent=1 // pred_region
      %s306 = ssub.s32 128, 128
      %307 = vsyncadd [#allocation4], %s306
      %s309 = sshll.u32 [#allocation7], 4
      %s310 = int_to_ptr.vmem [resolvable:$true] %s309
      %312 = dma.vmem_to_hbm [thread:$0]  %s310, 128, %s3, [#allocation4]
    $region25: #{nalu_forward.1} parent=1 // pred_fallthru
      _
    // Predicated region
    $region26: #{nalu_forward.1} parent=1 // pred_check
      _
    $region27: #{nalu_forward.1} parent=1 // pred_check_branch
      %314 = sbr.rel (0) target = $region29
    $region28: #{nalu_forward.1} parent=1 // pred_region
      %315 = dma.done [#allocation4], 128
    $region29: #{nalu_forward.1} parent=1 // pred_fallthru
      _
    %316 = vsyncpa [#allocation3], 1
    %317 = vsyncpa [#allocation6], 1
    %318 = vsyncpa [#allocation4], 1

</llo_original>
